<compile_context>
chip_gen: v7x
topology: tpu7x:2x2x1
jax: 0.10.0
libtpu: 0.0.40
codegen_flags: <defaults>
</compile_context>

<pallas_src>
import jax
import jax.numpy as jnp
from jax.experimental import pallas as pl
from jax.experimental.pallas import tpu as pltpu

TB_MAX = 1024  # max batch rows per grid step


def _round_up(n, m):
    return ((n + m - 1) // m) * m


def _generator_kernel(x_ref, w1_ref, b1_ref, w2_ref, b2_ref, w3_ref, b3_ref, o_ref):
    # Layer 1: Linear + ReLU. bf16 operands into the MXU, f32 accumulate,
    # f32 element-wise.
    h = jnp.dot(x_ref[...].astype(jnp.bfloat16), w1_ref[...],
                preferred_element_type=jnp.float32)
    h = jnp.maximum(h + b1_ref[...], 0.0)
    # Layer 2: Linear + ReLU.
    h = jnp.dot(h.astype(jnp.bfloat16), w2_ref[...],
                preferred_element_type=jnp.float32)
    h = jnp.maximum(h + b2_ref[...], 0.0)
    # Layer 3: Linear + Sigmoid (exp and approx reciprocal both land on the EUP).
    h = jnp.dot(h.astype(jnp.bfloat16), w3_ref[...],
                preferred_element_type=jnp.float32)
    h = h + b3_ref[...]
    o_ref[...] = pl.reciprocal(1.0 + jnp.exp(-h), approx=True).astype(o_ref.dtype)


def prepare_params(params):
    """One-time parameter prep (hoisted out of the per-call path).

    * pads W1's input dim up to a multiple of 128 (lane-dense x block),
    * pads W3/b3's output dim 784 -> 896 (= 7*128, unmasked output store),
    * casts weights to bf16 (MXU operands); biases stay f32, shape (1, fan_out).
    """
    w1, b1, w2, b2, w3, b3 = params
    in_features = w1.shape[0]
    out_features = w3.shape[1]
    in_pad = _round_up(in_features, 128)
    out_pad = _round_up(out_features, 128)
    w1p = jnp.pad(w1, ((0, in_pad - in_features), (0, 0))).astype(jnp.bfloat16)
    w3p = jnp.pad(w3, ((0, 0), (0, out_pad - out_features))).astype(jnp.bfloat16)
    b3p = jnp.pad(b3, ((0, 0), (0, out_pad - out_features))).astype(jnp.float32)
    return dict(
        w1=w1p, b1=b1.astype(jnp.float32),
        w2=w2.astype(jnp.bfloat16), b2=b2.astype(jnp.float32),
        w3=w3p, b3=b3p,
        in_features=in_features, in_pad=in_pad,
        out_features=out_features, out_pad=out_pad,
    )


def generator_forward(x, prep):
    """x: (B, in_features) f32 -> (B, 1, 28, 28) f32."""
    B, in_features = x.shape
    assert in_features == prep["in_features"]
    assert prep["out_features"] == 28 * 28, "view(-1,1,28,28) requires out_features == 784"
    in_pad, out_pad = prep["in_pad"], prep["out_pad"]

    # Balanced batch tiles: at most TB_MAX rows per step, each a multiple of 8
    # sublanes; padding waste is capped at <8 rows per tile and every store is
    # a full, unmasked vst.
    n_tiles = pl.cdiv(B, TB_MAX)
    tb = _round_up(pl.cdiv(B, n_tiles), 8)
    # v7x has 2 TensorCores: ensure the "parallel" batch axis has >=2 steps to
    # shard whenever the batch is big enough to split.
    if B >= 16 and _round_up(B, tb) // tb == 1:
        tb = _round_up(pl.cdiv(B, 2), 8)
    b_pad = _round_up(B, tb)
    grid = (b_pad // tb,)

    # Pad batch (full final tile) and feature dim (lane-dense 128-multiple K).
    if b_pad != B or in_pad != in_features:
        x = jnp.pad(x, ((0, b_pad - B), (0, in_pad - in_features)))

    # Weights/biases: constant index_map -> fetched once, VMEM-resident across
    # all batch tiles (~0.65 MB bf16). x/out: tiled over the batch axis.
    def resident(a):
        return pl.BlockSpec(a.shape, lambda i: (0,) * a.ndim)

    w1, b1, w2, b2, w3, b3 = (prep[k] for k in ("w1", "b1", "w2", "b2", "w3", "b3"))

    y = pl.pallas_call(
        _generator_kernel,
        out_shape=jax.ShapeDtypeStruct((b_pad, out_pad), jnp.float32),
        grid_spec=pltpu.PrefetchScalarGridSpec(
            num_scalar_prefetch=0,
            grid=grid,
            in_specs=[
                pl.BlockSpec((tb, in_pad), lambda i: (i, 0)),
                resident(w1), resident(b1),
                resident(w2), resident(b2),
                resident(w3), resident(b3),
            ],
            out_specs=pl.BlockSpec((tb, out_pad), lambda i: (i, 0)),
        ),
        compiler_params=pltpu.CompilerParams(
            dimension_semantics=("parallel",),
            vmem_limit_bytes=32 * 1024 * 1024,
        ),
    )(x, w1, b1, w2, b2, w3, b3)

    # Drop batch/lane padding, then NCHW view == x.view(-1, 1, 28, 28).
    return y[:B, :prep["out_features"]].reshape(-1, 1, 28, 28)


def init_params(key, in_features, out_features):
    """Deterministic init matching nn.Linear's U(-1/sqrt(fan_in), 1/sqrt(fan_in)).

    Weights are stored transposed, shape (fan_in, fan_out), so the kernel can do
    x @ W directly. Biases kept as (1, fan_out) for lane-aligned broadcast.
    """
    dims = [(in_features, 256), (256, 256), (256, out_features)]
    params = []
    for (fan_in, fan_out) in dims:
        key, kw, kb = jax.random.split(key, 3)
        bound = 1.0 / jnp.sqrt(jnp.float32(fan_in))
        w = jax.random.uniform(kw, (fan_in, fan_out), jnp.float32, -bound, bound)
        b = jax.random.uniform(kb, (1, fan_out), jnp.float32, -bound, bound)
        params += [w, b]
    return tuple(params)


if __name__ == "__main__":
    key = jax.random.PRNGKey(0)
    B, in_features, out_features = 8, 64, 28 * 28

    kx, kp = jax.random.split(key)
    x = jax.random.normal(kx, (B, in_features), jnp.float32)
    params = init_params(kp, in_features, out_features)

    prep = prepare_params(params)          # one-time: pads + bf16 casts
    out = generator_forward(x, prep)
    out = jax.block_until_ready(out)

    # Reference check in plain JAX: exact sigmoid, full f32 weights.
    w1, b1, w2, b2, w3, b3 = params
    h = jnp.maximum(x @ w1 + b1, 0.0)
    h = jnp.maximum(h @ w2 + b2, 0.0)
    ref = (1.0 / (1.0 + jnp.exp(-(h @ w3 + b3)))).reshape(-1, 1, 28, 28)

    assert out.shape == (B, 1, 28, 28), out.shape
    # bf16 MXU operands (+ EUP approx reciprocal) vs exact f32 reference:
    # pre-activation error is ~1e-2 relative at worst; sigmoid keeps the
    # absolute output error well inside 2e-2.
    assert jnp.allclose(out, ref, atol=2e-2, rtol=2e-2), float(
        jnp.max(jnp.abs(out - ref)))
    print("KERNEL_OK")
</pallas_src>

<mosaic_0001>
module attributes {stable_mosaic.version = 11 : i64} {
  func.func @_generator_kernel(%arg0: i32, %arg1: memref<8x128xf32, #tpu.memory_space<vmem>>, %arg2: memref<128x256xbf16, #tpu.memory_space<vmem>>, %arg3: memref<1x256xf32, #tpu.memory_space<vmem>>, %arg4: memref<256x256xbf16, #tpu.memory_space<vmem>>, %arg5: memref<1x256xf32, #tpu.memory_space<vmem>>, %arg6: memref<256x896xbf16, #tpu.memory_space<vmem>>, %arg7: memref<1x896xf32, #tpu.memory_space<vmem>>, %arg8: memref<8x896xf32, #tpu.memory_space<vmem>>) attributes {dimension_semantics = [#tpu.dimension_semantics<parallel>], iteration_bounds = array<i64: 1>, scalar_prefetch = 0 : i64, scratch_operands = 0 : i64, tpu.core_type = #tpu.core_type<tc>, window_params = [{transform_indices = @transform_0, window_bounds = array<i64: 8, 128>}, {pipeline_mode = #tpu.pipeline_mode<synchronous>, transform_indices = @transform_1, window_bounds = array<i64: 128, 256>}, {pipeline_mode = #tpu.pipeline_mode<synchronous>, transform_indices = @transform_2, window_bounds = array<i64: 1, 256>}, {pipeline_mode = #tpu.pipeline_mode<synchronous>, transform_indices = @transform_3, window_bounds = array<i64: 256, 256>}, {pipeline_mode = #tpu.pipeline_mode<synchronous>, transform_indices = @transform_4, window_bounds = array<i64: 1, 256>}, {pipeline_mode = #tpu.pipeline_mode<synchronous>, transform_indices = @transform_5, window_bounds = array<i64: 256, 896>}, {pipeline_mode = #tpu.pipeline_mode<synchronous>, transform_indices = @transform_6, window_bounds = array<i64: 1, 896>}, {transform_indices = @transform_7, window_bounds = array<i64: 8, 896>}]} {
    %c0 = arith.constant 0 : index
    %c0_0 = arith.constant 0 : index
    %0 = vector.load %arg1[%c0, %c0_0] : memref<8x128xf32, #tpu.memory_space<vmem>>, vector<8x128xf32>
    %1 = arith.truncf %0 : vector<8x128xf32> to vector<8x128xbf16>
    %c0_1 = arith.constant 0 : index
    %c0_2 = arith.constant 0 : index
    %2 = vector.load %arg2[%c0_1, %c0_2] : memref<128x256xbf16, #tpu.memory_space<vmem>>, vector<128x256xbf16>
    %cst = arith.constant dense<0.000000e+00> : vector<8x256xf32>
    %3 = tpu.matmul %1, %2, %cst {dimension_numbers = #tpu.dot_dimension_numbers<[1], [0], [0], [1], [0, 0, 1, 1], [], []>} : vector<8x128xbf16>, vector<128x256xbf16>, vector<8x256xf32> -> vector<8x256xf32>
    %c0_3 = arith.constant 0 : index
    %c0_4 = arith.constant 0 : index
    %4 = vector.load %arg3[%c0_3, %c0_4] : memref<1x256xf32, #tpu.memory_space<vmem>>, vector<1x256xf32>
    %5 = vector.broadcast %4 : vector<1x256xf32> to vector<8x256xf32>
    %6 = arith.addf %3, %5 : vector<8x256xf32>
    %cst_5 = arith.constant 0.000000e+00 : f32
    %7 = vector.broadcast %cst_5 : f32 to vector<8x256xf32>
    %8 = arith.maximumf %6, %7 : vector<8x256xf32>
    %9 = arith.truncf %8 : vector<8x256xf32> to vector<8x256xbf16>
    %c0_6 = arith.constant 0 : index
    %c0_7 = arith.constant 0 : index
    %10 = vector.load %arg4[%c0_6, %c0_7] : memref<256x256xbf16, #tpu.memory_space<vmem>>, vector<256x256xbf16>
    %cst_8 = arith.constant dense<0.000000e+00> : vector<8x256xf32>
    %11 = tpu.matmul %9, %10, %cst_8 {dimension_numbers = #tpu.dot_dimension_numbers<[1], [0], [0], [1], [0, 0, 1, 1], [], []>} : vector<8x256xbf16>, vector<256x256xbf16>, vector<8x256xf32> -> vector<8x256xf32>
    %c0_9 = arith.constant 0 : index
    %c0_10 = arith.constant 0 : index
    %12 = vector.load %arg5[%c0_9, %c0_10] : memref<1x256xf32, #tpu.memory_space<vmem>>, vector<1x256xf32>
    %13 = vector.broadcast %12 : vector<1x256xf32> to vector<8x256xf32>
    %14 = arith.addf %11, %13 : vector<8x256xf32>
    %cst_11 = arith.constant 0.000000e+00 : f32
    %15 = vector.broadcast %cst_11 : f32 to vector<8x256xf32>
    %16 = arith.maximumf %14, %15 : vector<8x256xf32>
    %17 = arith.truncf %16 : vector<8x256xf32> to vector<8x256xbf16>
    %c0_12 = arith.constant 0 : index
    %c0_13 = arith.constant 0 : index
    %18 = vector.load %arg6[%c0_12, %c0_13] : memref<256x896xbf16, #tpu.memory_space<vmem>>, vector<256x896xbf16>
    %cst_14 = arith.constant dense<0.000000e+00> : vector<8x896xf32>
    %19 = tpu.matmul %17, %18, %cst_14 {dimension_numbers = #tpu.dot_dimension_numbers<[1], [0], [0], [1], [0, 0, 1, 1], [], []>} : vector<8x256xbf16>, vector<256x896xbf16>, vector<8x896xf32> -> vector<8x896xf32>
    %c0_15 = arith.constant 0 : index
    %c0_16 = arith.constant 0 : index
    %20 = vector.load %arg7[%c0_15, %c0_16] : memref<1x896xf32, #tpu.memory_space<vmem>>, vector<1x896xf32>
    %21 = vector.broadcast %20 : vector<1x896xf32> to vector<8x896xf32>
    %22 = arith.addf %19, %21 : vector<8x896xf32>
    %cst_17 = arith.constant 0.000000e+00 : f32
    %23 = vector.broadcast %cst_17 : f32 to vector<8x896xf32>
    %24 = arith.subf %23, %22 : vector<8x896xf32>
    %25 = math.exp %24 : vector<8x896xf32>
    %cst_18 = arith.constant 1.000000e+00 : f32
    %26 = vector.broadcast %cst_18 : f32 to vector<8x896xf32>
    %27 = arith.addf %26, %25 : vector<8x896xf32>
    %28 = tpu.reciprocal %27 {approx = true} : vector<8x896xf32> -> vector<8x896xf32>
    %c0_19 = arith.constant 0 : index
    %c0_20 = arith.constant 0 : index
    %29 = vector.load %arg8[%c0_19, %c0_20] : memref<8x896xf32, #tpu.memory_space<vmem>>, vector<8x896xf32>
    tpu.vector_store %arg8[%c0_19, %c0_20], %28 {strides = array<i32>} : memref<8x896xf32, #tpu.memory_space<vmem>>, vector<8x896xf32>,
    return
  }
  func.func @transform_0(%arg0: i32) -> (i32, i32) {
    %c0_i32 = arith.constant 0 : i32
    %c0_i32_0 = arith.constant 0 : i32
    return %arg0, %c0_i32 : i32, i32
  }
  func.func @transform_1(%arg0: i32) -> (i32, i32) {
    %c0_i32 = arith.constant 0 : i32
    %c0_i32_0 = arith.constant 0 : i32
    %c0_i32_1 = arith.constant 0 : i32
    return %c0_i32, %c0_i32_0 : i32, i32
  }
  func.func @transform_2(%arg0: i32) -> (i32, i32) {
    %c0_i32 = arith.constant 0 : i32
    %c0_i32_0 = arith.constant 0 : i32
    %c0_i32_1 = arith.constant 0 : i32
    return %c0_i32, %c0_i32_0 : i32, i32
  }
  func.func @transform_3(%arg0: i32) -> (i32, i32) {
    %c0_i32 = arith.constant 0 : i32
    %c0_i32_0 = arith.constant 0 : i32
    %c0_i32_1 = arith.constant 0 : i32
    return %c0_i32, %c0_i32_0 : i32, i32
  }
  func.func @transform_4(%arg0: i32) -> (i32, i32) {
    %c0_i32 = arith.constant 0 : i32
    %c0_i32_0 = arith.constant 0 : i32
    %c0_i32_1 = arith.constant 0 : i32
    return %c0_i32, %c0_i32_0 : i32, i32
  }
  func.func @transform_5(%arg0: i32) -> (i32, i32) {
    %c0_i32 = arith.constant 0 : i32
    %c0_i32_0 = arith.constant 0 : i32
    %c0_i32_1 = arith.constant 0 : i32
    return %c0_i32, %c0_i32_0 : i32, i32
  }
  func.func @transform_6(%arg0: i32) -> (i32, i32) {
    %c0_i32 = arith.constant 0 : i32
    %c0_i32_0 = arith.constant 0 : i32
    %c0_i32_1 = arith.constant 0 : i32
    return %c0_i32, %c0_i32_0 : i32, i32
  }
  func.func @transform_7(%arg0: i32) -> (i32, i32) {
    %c0_i32 = arith.constant 0 : i32
    %c0_i32_0 = arith.constant 0 : i32
    return %arg0, %c0_i32 : i32, i32
  }
}

</mosaic_0001>

<llo_original>
// kernel: tpu_custom_call.1
$region0: #{tpu_custom_call.1}
  #allocation0 [shape = 'u32[]', space=smem, size = 0x4, offset = 0x4, fixed_abs, tag = 'smem constant byte address 0x4 - core index']
  #allocation1 [shape = 'u32[144,128]{1,0:T(1,128)}', space=vmem, size = 0x12000, scoped, tag = 'internal scratch']
  %s0 = inlined_call_operand.hbm [shape: f32[8,128], index: 0, kind: input, shape index: {}]
  %s1 = inlined_call_operand.hbm [shape: bf16[128,256], index: 1, kind: input, shape index: {}]
  %s2 = inlined_call_operand.vmem [shape: f32[1,256], index: 2, kind: input, shape index: {}]
  %s3 = inlined_call_operand.hbm [shape: bf16[256,256], index: 3, kind: input, shape index: {}]
  %s4 = inlined_call_operand.vmem [shape: f32[1,256], index: 4, kind: input, shape index: {}]
  %s5 = inlined_call_operand.hbm [shape: bf16[256,896], index: 5, kind: input, shape index: {}]
  %s6 = inlined_call_operand.vmem [shape: f32[1,896], index: 6, kind: input, shape index: {}]
  %s7 = inlined_call_operand.hbm [shape: f32[8,896], index: 7, kind: output, shape index: {}]
  %s8 = sld [smem:[#allocation0]]
  $region54: #{tpu_custom_call.1} parent=0
    _
  %s10 = ssub.s32 1, %s8
  %s11 = scalar_select 0, %s10, %s8
  $region1: #{tpu_custom_call.1} parent=0
    #allocation2 [shape = 'u8[4096]{0}', space=vmem, size = 0x1000, scoped, tag = 'input window, operand 0, single buffered']
    #allocation3 [shape = 's32[1]{0}', space=sflag, size = 0x4, scoped, tag = 'scoped memory for tpu_custom_call.1']
    #allocation4 [shape = 's32[1]{0}', space=sflag, size = 0x4, scoped, tag = 'scoped memory for tpu_custom_call.1']
    #allocation5 [shape = 'u8[65536]{0}', space=vmem, size = 0x10000, scoped, tag = 'input window, operand 1, single buffered']
    #allocation6 [shape = 's32[1]{0}', space=sflag, size = 0x4, scoped, tag = 'scoped memory for tpu_custom_call.1']
    #allocation7 [shape = 'u8[131072]{0}', space=vmem, size = 0x20000, scoped, tag = 'input window, operand 3, single buffered']
    #allocation8 [shape = 'u8[458752]{0}', space=vmem, size = 0x70000, scoped, tag = 'input window, operand 5, single buffered']
    #allocation9 [shape = 's32[1]{0}', space=sflag, size = 0x4, scoped, tag = 'scoped memory for tpu_custom_call.1']
    #allocation10 [shape = 'u8[28672]{0}', space=vmem, size = 0x7000, scoped, tag = 'output window, operand 0, single buffered']
    %12 = vsyncpa [#allocation3], 0
    %13 = vsyncpa [#allocation6], 0
    %14 = vsyncpa [#allocation9], 0
    %15 = vsyncpa [#allocation4], 0
    // Predicated region
    $region2: #{tpu_custom_call.1} parent=1 // pred_check
      _
    $region3: #{tpu_custom_call.1} parent=1 // pred_check_branch
      %17 = sbr.rel (0) target = $region5
    $region4: #{tpu_custom_call.1} parent=1 // pred_region
      %s19 = ssub.s32 128, 128
      %20 = vsyncadd [#allocation3], %s19
      %s22 = sshll.u32 [#allocation2], 4
      %s23 = int_to_ptr.vmem [resolvable:$true] %s22
      %25 = dma.hbm_to_vmem [thread:$0]  %s0, 128, %s23, [#allocation3]
    $region5: #{tpu_custom_call.1} parent=1 // pred_fallthru
      _
    // Predicated region
    $region6: #{tpu_custom_call.1} parent=1 // pred_check
      _
    $region7: #{tpu_custom_call.1} parent=1 // pred_check_branch
      %27 = sbr.rel (0) target = $region9
    $region8: #{tpu_custom_call.1} parent=1 // pred_region
      %s29 = ssub.s32 2048, 2048
      %30 = vsyncadd [#allocation6], %s29
      %s31 = sshll.u32 [#allocation5], 4
      %s32 = int_to_ptr.vmem [resolvable:$true] %s31
      %37 = dma.hbm_to_vmem [thread:$0]  %s1, 2048, %s32, [#allocation6], 128, 128, 8
    $region9: #{tpu_custom_call.1} parent=1 // pred_fallthru
      _
    // Predicated region
    $region10: #{tpu_custom_call.1} parent=1 // pred_check
      _
    $region11: #{tpu_custom_call.1} parent=1 // pred_check_branch
      %39 = sbr.rel (0) target = $region13
    $region12: #{tpu_custom_call.1} parent=1 // pred_region
      _
    $region13: #{tpu_custom_call.1} parent=1 // pred_fallthru
      _
    // Predicated region
    $region14: #{tpu_custom_call.1} parent=1 // pred_check
      _
    $region15: #{tpu_custom_call.1} parent=1 // pred_check_branch
      %41 = sbr.rel (0) target = $region17
    $region16: #{tpu_custom_call.1} parent=1 // pred_region
      %s43 = ssub.s32 4096, 4096
      %44 = vsyncadd [#allocation6], %s43
      %s45 = sshll.u32 [#allocation7], 4
      %s46 = int_to_ptr.vmem [resolvable:$true] %s45
      %51 = dma.hbm_to_vmem [thread:$0]  %s3, 4096, %s46, [#allocation6], 128, 128, 8
    $region17: #{tpu_custom_call.1} parent=1 // pred_fallthru
      _
    // Predicated region
    $region18: #{tpu_custom_call.1} parent=1 // pred_check
      _
    $region19: #{tpu_custom_call.1} parent=1 // pred_check_branch
      %53 = sbr.rel (0) target = $region21
    $region20: #{tpu_custom_call.1} parent=1 // pred_region
      _
    $region21: #{tpu_custom_call.1} parent=1 // pred_fallthru
      _
    // Predicated region
    $region22: #{tpu_custom_call.1} parent=1 // pred_check
      _
    $region23: #{tpu_custom_call.1} parent=1 // pred_check_branch
      %55 = sbr.rel (0) target = $region25
    $region24: #{tpu_custom_call.1} parent=1 // pred_region
      %s57 = ssub.s32 14336, 14336
      %58 = vsyncadd [#allocation9], %s57
      %s59 = sshll.u32 [#allocation8], 4
      %s60 = int_to_ptr.vmem [resolvable:$true] %s59
      %65 = dma.hbm_to_vmem [thread:$0]  %s5, 14336, %s60, [#allocation9], 448, 448, 28
    $region25: #{tpu_custom_call.1} parent=1 // pred_fallthru
      _
    // Predicated region
    $region26: #{tpu_custom_call.1} parent=1 // pred_check
      _
    $region27: #{tpu_custom_call.1} parent=1 // pred_check_branch
      %67 = sbr.rel (0) target = $region29
    $region28: #{tpu_custom_call.1} parent=1 // pred_region
      _
    $region29: #{tpu_custom_call.1} parent=1 // pred_fallthru
      _
    // Predicated region
    $region30: #{tpu_custom_call.1} parent=1 // pred_check
      _
    $region31: #{tpu_custom_call.1} parent=1 // pred_check_branch
      %69 = sbr.rel (0) target = $region33
    $region32: #{tpu_custom_call.1} parent=1 // pred_region
      %70 = dma.done [#allocation3], 128
    $region33: #{tpu_custom_call.1} parent=1 // pred_fallthru
      _
    // Predicated region
    $region34: #{tpu_custom_call.1} parent=1 // pred_check
      _
    $region35: #{tpu_custom_call.1} parent=1 // pred_check_branch
      %72 = sbr.rel (0) target = $region37
    $region36: #{tpu_custom_call.1} parent=1 // pred_region
      %73 = dma.done [#allocation6], 2048
    $region37: #{tpu_custom_call.1} parent=1 // pred_fallthru
      _
    // Predicated region
    $region38: #{tpu_custom_call.1} parent=1 // pred_check
      _
    $region39: #{tpu_custom_call.1} parent=1 // pred_check_branch
      %75 = sbr.rel (0) target = $region41
    $region40: #{tpu_custom_call.1} parent=1 // pred_region
      %76 = dma.done [#allocation6], 4096
    $region41: #{tpu_custom_call.1} parent=1 // pred_fallthru
      _
    // Predicated region
    $region42: #{tpu_custom_call.1} parent=1 // pred_check
      _
    $region43: #{tpu_custom_call.1} parent=1 // pred_check_branch
      %78 = sbr.rel (0) target = $region45
    $region44: #{tpu_custom_call.1} parent=1 // pred_region
      %79 = dma.done [#allocation9], 14336
    $region45: #{tpu_custom_call.1} parent=1 // pred_fallthru
      _
    %v81 = vld [vmem:[#allocation2] sm:$0xff]
    %v82 = vpack.c.bf16 %v81, %v81
    %v83 = vld [vmem:[#allocation5] sm:$0xff]
    %v84 = vld [vmem:[#allocation5 + $0x8] sm:$0xff]
    %v85 = vld [vmem:[#allocation5 + $0x10] sm:$0xff]
    %v86 = vld [vmem:[#allocation5 + $0x18] sm:$0xff]
    %v87 = vld [vmem:[#allocation5 + $0x20] sm:$0xff]
    %v88 = vld [vmem:[#allocation5 + $0x28] sm:$0xff]
    %v89 = vld [vmem:[#allocation5 + $0x30] sm:$0xff]
    %v90 = vld [vmem:[#allocation5 + $0x38] sm:$0xff]
    %v91 = vld [vmem:[#allocation5 + $0x40] sm:$0xff]
    %v92 = vld [vmem:[#allocation5 + $0x48] sm:$0xff]
    %v93 = vld [vmem:[#allocation5 + $0x50] sm:$0xff]
    %v94 = vld [vmem:[#allocation5 + $0x58] sm:$0xff]
    %v95 = vld [vmem:[#allocation5 + $0x60] sm:$0xff]
    %v96 = vld [vmem:[#allocation5 + $0x68] sm:$0xff]
    %v97 = vld [vmem:[#allocation5 + $0x70] sm:$0xff]
    %v98 = vld [vmem:[#allocation5 + $0x78] sm:$0xff]
    %v99 = vld [vmem:[%s2] sm:$0x3]
    %v101 = vlaneseq
    %v102 = vshrl.u32 %v101, 7
    %v103 = vsub.s32 0, %v102
    %v104 = vrot.slane %v99, %v103
    %v105 = vlaneseq
    %v106 = vshrl.u32 %v105, 7
    %v107 = vsub.s32 1, %v106
    %v108 = vrot.slane %v99, %v107
    %v127 = vunpack.c.l.b16 %v83
    %v128 = vunpack.c.h.b16 %v83
    %v129 = vunpack.c.l.b16 %v84
    %v130 = vunpack.c.h.b16 %v84
    %v131 = vunpack.c.l.b16 %v85
    %v132 = vunpack.c.h.b16 %v85
    %v133 = vunpack.c.l.b16 %v86
    %v134 = vunpack.c.h.b16 %v86
    %v135 = vunpack.c.l.b16 %v87
    %v136 = vunpack.c.h.b16 %v87
    %v137 = vunpack.c.l.b16 %v88
    %v138 = vunpack.c.h.b16 %v88
    %v139 = vunpack.c.l.b16 %v89
    %v140 = vunpack.c.h.b16 %v89
    %v141 = vunpack.c.l.b16 %v90
    %v142 = vunpack.c.h.b16 %v90
    %v143 = vunpack.c.l.b16 %v91
    %v144 = vunpack.c.h.b16 %v91
    %v145 = vunpack.c.l.b16 %v92
    %v146 = vunpack.c.h.b16 %v92
    %v147 = vunpack.c.l.b16 %v93
    %v148 = vunpack.c.h.b16 %v93
    %v149 = vunpack.c.l.b16 %v94
    %v150 = vunpack.c.h.b16 %v94
    %v151 = vunpack.c.l.b16 %v95
    %v152 = vunpack.c.h.b16 %v95
    %v153 = vunpack.c.l.b16 %v96
    %v154 = vunpack.c.h.b16 %v96
    %v155 = vunpack.c.l.b16 %v97
    %v156 = vunpack.c.h.b16 %v97
    %v157 = vunpack.c.l.b16 %v98
    %v158 = vunpack.c.h.b16 %v98
    %v159 = vpack.c.b16 %v129, %v127
    %v160 = vpack.c.b16 %v130, %v128
    %v161 = vpack.c.b16 %v133, %v131
    %v162 = vpack.c.b16 %v134, %v132
    %v163 = vpack.c.b16 %v137, %v135
    %v164 = vpack.c.b16 %v138, %v136
    %v165 = vpack.c.b16 %v141, %v139
    %v166 = vpack.c.b16 %v142, %v140
    %v167 = vpack.c.b16 %v145, %v143
    %v168 = vpack.c.b16 %v146, %v144
    %v169 = vpack.c.b16 %v149, %v147
    %v170 = vpack.c.b16 %v150, %v148
    %v171 = vpack.c.b16 %v153, %v151
    %v172 = vpack.c.b16 %v154, %v152
    %v173 = vpack.c.b16 %v157, %v155
    %v174 = vpack.c.b16 %v158, %v156
    %191 = vmatprep.subr.bf16.mxu0 %v160
    %192 = vmatpush1.bf16.msra.mxu0 %v159
    %193 = vmatprep.subr.bf16.mxu0 %v162
    %194 = vmatpush1.bf16.msra.mxu0 %v161
    %195 = vmatprep.subr.bf16.mxu0 %v164
    %196 = vmatpush1.bf16.msra.mxu0 %v163
    %197 = vmatprep.subr.bf16.mxu0 %v166
    %198 = vmatpush1.bf16.msra.mxu0 %v165
    %199 = vmatprep.subr.bf16.mxu0 %v168
    %200 = vmatpush1.bf16.msra.mxu0 %v167
    %201 = vmatprep.subr.bf16.mxu0 %v170
    %202 = vmatpush1.bf16.msra.mxu0 %v169
    %203 = vmatprep.subr.bf16.mxu0 %v172
    %204 = vmatpush1.bf16.msra.mxu0 %v171
    %205 = vmatprep.subr.bf16.mxu0 %v174
    %206 = vmatpush1.bf16.msra.mxu0 %v173
    %207 = vmatprep.subr.bf16.mxu0 0
    %208 = vmatpush1.bf16.msra.mxu0 0
    %209 = vmatprep.subr.bf16.mxu0 0
    %210 = vmatpush1.bf16.msra.mxu0 0
    %211 = vmatprep.subr.bf16.mxu0 0
    %212 = vmatpush1.bf16.msra.mxu0 0
    %213 = vmatprep.subr.bf16.mxu0 0
    %214 = vmatpush1.bf16.msra.mxu0 0
    %215 = vmatprep.subr.bf16.mxu0 0
    %216 = vmatpush1.bf16.msra.mxu0 0
    %217 = vmatprep.subr.bf16.mxu0 0
    %218 = vmatpush1.bf16.msra.mxu0 0
    %219 = vmatprep.subr.bf16.mxu0 0
    %220 = vmatpush1.bf16.msra.mxu0 0
    %221 = vmatprep.subr.bf16.mxu0 0
    %222 = vmatpush1.bf16.msra.mxu0 0
    %223 = vmatprep.mubr.bf16.mxu0 0
    %224 = vmatmul.mubr.bf16.gmra.mrb[0].mxu0 %v82
    %v225 = vpop.f32.mrb[0].mxu0
    %v226 = vadd.f32 %v104, %v225
    %v227 = vpop.f32.mrb[0].mxu0
    %v228 = vadd.f32 %v108, %v227
    %v229 = vpop.f32.mrb[0].mxu0
    %v230 = vpop.f32.mrb[0].mxu0
    %231 = vdwg.mxu0
    %v232 = vmax.f32 %v226, 0.0
    %v233 = vmax.f32 %v228, 0.0
    %v234 = vpack.c.bf16 %v232, %v232
    %v235 = vpack.c.bf16 %v233, %v233
    %v236 = vld [vmem:[#allocation7] sm:$0xff]
    %v237 = vld [vmem:[#allocation7 + $0x8] sm:$0xff]
    %v238 = vld [vmem:[#allocation7 + $0x10] sm:$0xff]
    %v239 = vld [vmem:[#allocation7 + $0x18] sm:$0xff]
    %v240 = vld [vmem:[#allocation7 + $0x20] sm:$0xff]
    %v241 = vld [vmem:[#allocation7 + $0x28] sm:$0xff]
    %v242 = vld [vmem:[#allocation7 + $0x30] sm:$0xff]
    %v243 = vld [vmem:[#allocation7 + $0x38] sm:$0xff]
    %v244 = vld [vmem:[#allocation7 + $0x40] sm:$0xff]
    %v245 = vld [vmem:[#allocation7 + $0x48] sm:$0xff]
    %v246 = vld [vmem:[#allocation7 + $0x50] sm:$0xff]
    %v247 = vld [vmem:[#allocation7 + $0x58] sm:$0xff]
    %v248 = vld [vmem:[#allocation7 + $0x60] sm:$0xff]
    %v249 = vld [vmem:[#allocation7 + $0x68] sm:$0xff]
    %v250 = vld [vmem:[#allocation7 + $0x70] sm:$0xff]
    %v251 = vld [vmem:[#allocation7 + $0x78] sm:$0xff]
    %v252 = vld [vmem:[#allocation7 + $0x80] sm:$0xff]
    %v253 = vld [vmem:[#allocation7 + $0x88] sm:$0xff]
    %v254 = vld [vmem:[#allocation7 + $0x90] sm:$0xff]
    %v255 = vld [vmem:[#allocation7 + $0x98] sm:$0xff]
    %v256 = vld [vmem:[#allocation7 + $0xa0] sm:$0xff]
    %v257 = vld [vmem:[#allocation7 + $0xa8] sm:$0xff]
    %v258 = vld [vmem:[#allocation7 + $0xb0] sm:$0xff]
    %v259 = vld [vmem:[#allocation7 + $0xb8] sm:$0xff]
    %v260 = vld [vmem:[#allocation7 + $0xc0] sm:$0xff]
    %v261 = vld [vmem:[#allocation7 + $0xc8] sm:$0xff]
    %v262 = vld [vmem:[#allocation7 + $0xd0] sm:$0xff]
    %v263 = vld [vmem:[#allocation7 + $0xd8] sm:$0xff]
    %v264 = vld [vmem:[#allocation7 + $0xe0] sm:$0xff]
    %v265 = vld [vmem:[#allocation7 + $0xe8] sm:$0xff]
    %v266 = vld [vmem:[#allocation7 + $0xf0] sm:$0xff]
    %v267 = vld [vmem:[#allocation7 + $0xf8] sm:$0xff]
    %v268 = vld [vmem:[%s4] sm:$0x3]
    %v270 = vlaneseq
    %v271 = vshrl.u32 %v270, 7
    %v272 = vsub.s32 0, %v271
    %v273 = vrot.slane %v268, %v272
    %v274 = vlaneseq
    %v275 = vshrl.u32 %v274, 7
    %v276 = vsub.s32 1, %v275
    %v277 = vrot.slane %v268, %v276
    %v312 = vunpack.c.l.b16 %v236
    %v313 = vunpack.c.h.b16 %v236
    %v314 = vunpack.c.l.b16 %v237
    %v315 = vunpack.c.h.b16 %v237
    %v316 = vunpack.c.l.b16 %v238
    %v317 = vunpack.c.h.b16 %v238
    %v318 = vunpack.c.l.b16 %v239
    %v319 = vunpack.c.h.b16 %v239
    %v320 = vunpack.c.l.b16 %v240
    %v321 = vunpack.c.h.b16 %v240
    %v322 = vunpack.c.l.b16 %v241
    %v323 = vunpack.c.h.b16 %v241
    %v324 = vunpack.c.l.b16 %v242
    %v325 = vunpack.c.h.b16 %v242
    %v326 = vunpack.c.l.b16 %v243
    %v327 = vunpack.c.h.b16 %v243
    %v328 = vunpack.c.l.b16 %v244
    %v329 = vunpack.c.h.b16 %v244
    %v330 = vunpack.c.l.b16 %v245
    %v331 = vunpack.c.h.b16 %v245
    %v332 = vunpack.c.l.b16 %v246
    %v333 = vunpack.c.h.b16 %v246
    %v334 = vunpack.c.l.b16 %v247
    %v335 = vunpack.c.h.b16 %v247
    %v336 = vunpack.c.l.b16 %v248
    %v337 = vunpack.c.h.b16 %v248
    %v338 = vunpack.c.l.b16 %v249
    %v339 = vunpack.c.h.b16 %v249
    %v340 = vunpack.c.l.b16 %v250
    %v341 = vunpack.c.h.b16 %v250
    %v342 = vunpack.c.l.b16 %v251
    %v343 = vunpack.c.h.b16 %v251
    %v344 = vunpack.c.l.b16 %v252
    %v345 = vunpack.c.h.b16 %v252
    %v346 = vunpack.c.l.b16 %v253
    %v347 = vunpack.c.h.b16 %v253
    %v348 = vunpack.c.l.b16 %v254
    %v349 = vunpack.c.h.b16 %v254
    %v350 = vunpack.c.l.b16 %v255
    %v351 = vunpack.c.h.b16 %v255
    %v352 = vunpack.c.l.b16 %v256
    %v353 = vunpack.c.h.b16 %v256
    %v354 = vunpack.c.l.b16 %v257
    %v355 = vunpack.c.h.b16 %v257
    %v356 = vunpack.c.l.b16 %v258
    %v357 = vunpack.c.h.b16 %v258
    %v358 = vunpack.c.l.b16 %v259
    %v359 = vunpack.c.h.b16 %v259
    %v360 = vunpack.c.l.b16 %v260
    %v361 = vunpack.c.h.b16 %v260
    %v362 = vunpack.c.l.b16 %v261
    %v363 = vunpack.c.h.b16 %v261
    %v364 = vunpack.c.l.b16 %v262
    %v365 = vunpack.c.h.b16 %v262
    %v366 = vunpack.c.l.b16 %v263
    %v367 = vunpack.c.h.b16 %v263
    %v368 = vunpack.c.l.b16 %v264
    %v369 = vunpack.c.h.b16 %v264
    %v370 = vunpack.c.l.b16 %v265
    %v371 = vunpack.c.h.b16 %v265
    %v372 = vunpack.c.l.b16 %v266
    %v373 = vunpack.c.h.b16 %v266
    %v374 = vunpack.c.l.b16 %v267
    %v375 = vunpack.c.h.b16 %v267
    %v376 = vpack.c.b16 %v314, %v312
    %v377 = vpack.c.b16 %v315, %v313
    %v378 = vpack.c.b16 %v318, %v316
    %v379 = vpack.c.b16 %v319, %v317
    %v380 = vpack.c.b16 %v322, %v320
    %v381 = vpack.c.b16 %v323, %v321
    %v382 = vpack.c.b16 %v326, %v324
    %v383 = vpack.c.b16 %v327, %v325
    %v384 = vpack.c.b16 %v330, %v328
    %v385 = vpack.c.b16 %v331, %v329
    %v386 = vpack.c.b16 %v334, %v332
    %v387 = vpack.c.b16 %v335, %v333
    %v388 = vpack.c.b16 %v338, %v336
    %v389 = vpack.c.b16 %v339, %v337
    %v390 = vpack.c.b16 %v342, %v340
    %v391 = vpack.c.b16 %v343, %v341
    %v392 = vpack.c.b16 %v346, %v344
    %v393 = vpack.c.b16 %v347, %v345
    %v394 = vpack.c.b16 %v350, %v348
    %v395 = vpack.c.b16 %v351, %v349
    %v396 = vpack.c.b16 %v354, %v352
    %v397 = vpack.c.b16 %v355, %v353
    %v398 = vpack.c.b16 %v358, %v356
    %v399 = vpack.c.b16 %v359, %v357
    %v400 = vpack.c.b16 %v362, %v360
    %v401 = vpack.c.b16 %v363, %v361
    %v402 = vpack.c.b16 %v366, %v364
    %v403 = vpack.c.b16 %v367, %v365
    %v404 = vpack.c.b16 %v370, %v368
    %v405 = vpack.c.b16 %v371, %v369
    %v406 = vpack.c.b16 %v374, %v372
    %v407 = vpack.c.b16 %v375, %v373
    %440 = vmatprep.subr.bf16.mxu0 %v377
    %441 = vmatpush1.bf16.msra.mxu0 %v376
    %442 = vmatprep.subr.bf16.mxu0 %v379
    %443 = vmatpush1.bf16.msra.mxu0 %v378
    %444 = vmatprep.subr.bf16.mxu0 %v381
    %445 = vmatpush1.bf16.msra.mxu0 %v380
    %446 = vmatprep.subr.bf16.mxu0 %v383
    %447 = vmatpush1.bf16.msra.mxu0 %v382
    %448 = vmatprep.subr.bf16.mxu0 %v385
    %449 = vmatpush1.bf16.msra.mxu0 %v384
    %450 = vmatprep.subr.bf16.mxu0 %v387
    %451 = vmatpush1.bf16.msra.mxu0 %v386
    %452 = vmatprep.subr.bf16.mxu0 %v389
    %453 = vmatpush1.bf16.msra.mxu0 %v388
    %454 = vmatprep.subr.bf16.mxu0 %v391
    %455 = vmatpush1.bf16.msra.mxu0 %v390
    %456 = vmatprep.subr.bf16.mxu0 %v393
    %457 = vmatpush1.bf16.msra.mxu0 %v392
    %458 = vmatprep.subr.bf16.mxu0 %v395
    %459 = vmatpush1.bf16.msra.mxu0 %v394
    %460 = vmatprep.subr.bf16.mxu0 %v397
    %461 = vmatpush1.bf16.msra.mxu0 %v396
    %462 = vmatprep.subr.bf16.mxu0 %v399
    %463 = vmatpush1.bf16.msra.mxu0 %v398
    %464 = vmatprep.subr.bf16.mxu0 %v401
    %465 = vmatpush1.bf16.msra.mxu0 %v400
    %466 = vmatprep.subr.bf16.mxu0 %v403
    %467 = vmatpush1.bf16.msra.mxu0 %v402
    %468 = vmatprep.subr.bf16.mxu0 %v405
    %469 = vmatpush1.bf16.msra.mxu0 %v404
    %470 = vmatprep.subr.bf16.mxu0 %v407
    %471 = vmatpush1.bf16.msra.mxu0 %v406
    %472 = vmatprep.mubr.bf16.mxu0 %v235
    %473 = vmatmul.mubr.bf16.gmra.mrb[0].mxu0 %v234
    %v474 = vpop.f32.mrb[0].mxu0
    %v475 = vadd.f32 %v273, %v474
    %v476 = vpop.f32.mrb[0].mxu0
    %v477 = vadd.f32 %v277, %v476
    %v478 = vpop.f32.mrb[0].mxu0
    %v479 = vpop.f32.mrb[0].mxu0
    %480 = vdwg.mxu0
    %v481 = vmax.f32 %v475, 0.0
    %v482 = vmax.f32 %v477, 0.0
    %v483 = vpack.c.bf16 %v481, %v481
    %v484 = vpack.c.bf16 %v482, %v482
    %v485 = vld [vmem:[#allocation8] sm:$0xff]
    %v486 = vld [vmem:[#allocation8 + $0x8] sm:$0xff]
    %v487 = vld [vmem:[#allocation8 + $0x10] sm:$0xff]
    %v488 = vld [vmem:[#allocation8 + $0x18] sm:$0xf]
    %v489 = vld [vmem:[#allocation8 + $0x1c] sm:$0xff]
    %v490 = vld [vmem:[#allocation8 + $0x24] sm:$0xff]
    %v491 = vld [vmem:[#allocation8 + $0x2c] sm:$0xff]
    %v492 = vld [vmem:[#allocation8 + $0x34] sm:$0xf]
    %v493 = vld [vmem:[#allocation8 + $0x38] sm:$0xff]
    %v494 = vld [vmem:[#allocation8 + $0x40] sm:$0xff]
    %v495 = vld [vmem:[#allocation8 + $0x48] sm:$0xff]
    %v496 = vld [vmem:[#allocation8 + $0x50] sm:$0xf]
    %v497 = vld [vmem:[#allocation8 + $0x54] sm:$0xff]
    %v498 = vld [vmem:[#allocation8 + $0x5c] sm:$0xff]
    %v499 = vld [vmem:[#allocation8 + $0x64] sm:$0xff]
    %v500 = vld [vmem:[#allocation8 + $0x6c] sm:$0xf]
    %v501 = vld [vmem:[#allocation8 + $0x70] sm:$0xff]
    %v502 = vld [vmem:[#allocation8 + $0x78] sm:$0xff]
    %v503 = vld [vmem:[#allocation8 + $0x80] sm:$0xff]
    %v504 = vld [vmem:[#allocation8 + $0x88] sm:$0xf]
    %v505 = vld [vmem:[#allocation8 + $0x8c] sm:$0xff]
    %v506 = vld [vmem:[#allocation8 + $0x94] sm:$0xff]
    %v507 = vld [vmem:[#allocation8 + $0x9c] sm:$0xff]
    %v508 = vld [vmem:[#allocation8 + $0xa4] sm:$0xf]
    %v509 = vld [vmem:[#allocation8 + $0xa8] sm:$0xff]
    %v510 = vld [vmem:[#allocation8 + $0xb0] sm:$0xff]
    %v511 = vld [vmem:[#allocation8 + $0xb8] sm:$0xff]
    %v512 = vld [vmem:[#allocation8 + $0xc0] sm:$0xf]
    %v513 = vld [vmem:[#allocation8 + $0xc4] sm:$0xff]
    %v514 = vld [vmem:[#allocation8 + $0xcc] sm:$0xff]
    %v515 = vld [vmem:[#allocation8 + $0xd4] sm:$0xff]
    %v516 = vld [vmem:[#allocation8 + $0xdc] sm:$0xf]
    %v517 = vld [vmem:[#allocation8 + $0xe0] sm:$0xff]
    %v518 = vld [vmem:[#allocation8 + $0xe8] sm:$0xff]
    %v519 = vld [vmem:[#allocation8 + $0xf0] sm:$0xff]
    %v520 = vld [vmem:[#allocation8 + $0xf8] sm:$0xf]
    %v521 = vld [vmem:[#allocation8 + $0xfc] sm:$0xff]
    %v522 = vld [vmem:[#allocation8 + $0x104] sm:$0xff]
    %v523 = vld [vmem:[#allocation8 + $0x10c] sm:$0xff]
    %v524 = vld [vmem:[#allocation8 + $0x114] sm:$0xf]
    %v525 = vld [vmem:[#allocation8 + $0x118] sm:$0xff]
    %v526 = vld [vmem:[#allocation8 + $0x120] sm:$0xff]
    %v527 = vld [vmem:[#allocation8 + $0x128] sm:$0xff]
    %v528 = vld [vmem:[#allocation8 + $0x130] sm:$0xf]
    %v529 = vld [vmem:[#allocation8 + $0x134] sm:$0xff]
    %v530 = vld [vmem:[#allocation8 + $0x13c] sm:$0xff]
    %v531 = vld [vmem:[#allocation8 + $0x144] sm:$0xff]
    %v532 = vld [vmem:[#allocation8 + $0x14c] sm:$0xf]
    %v533 = vld [vmem:[#allocation8 + $0x150] sm:$0xff]
    %v534 = vld [vmem:[#allocation8 + $0x158] sm:$0xff]
    %v535 = vld [vmem:[#allocation8 + $0x160] sm:$0xff]
    %v536 = vld [vmem:[#allocation8 + $0x168] sm:$0xf]
    %v537 = vld [vmem:[#allocation8 + $0x16c] sm:$0xff]
    %v538 = vld [vmem:[#allocation8 + $0x174] sm:$0xff]
    %v539 = vld [vmem:[#allocation8 + $0x17c] sm:$0xff]
    %v540 = vld [vmem:[#allocation8 + $0x184] sm:$0xf]
    %v541 = vld [vmem:[#allocation8 + $0x188] sm:$0xff]
    %v542 = vld [vmem:[#allocation8 + $0x190] sm:$0xff]
    %v543 = vld [vmem:[#allocation8 + $0x198] sm:$0xff]
    %v544 = vld [vmem:[#allocation8 + $0x1a0] sm:$0xf]
    %v545 = vld [vmem:[#allocation8 + $0x1a4] sm:$0xff]
    %v546 = vld [vmem:[#allocation8 + $0x1ac] sm:$0xff]
    %v547 = vld [vmem:[#allocation8 + $0x1b4] sm:$0xff]
    %v548 = vld [vmem:[#allocation8 + $0x1bc] sm:$0xf]
    %v549 = vld [vmem:[#allocation8 + $0x1c0] sm:$0xff]
    %v550 = vld [vmem:[#allocation8 + $0x1c8] sm:$0xff]
    %v551 = vld [vmem:[#allocation8 + $0x1d0] sm:$0xff]
    %v552 = vld [vmem:[#allocation8 + $0x1d8] sm:$0xf]
    %v553 = vld [vmem:[#allocation8 + $0x1dc] sm:$0xff]
    %v554 = vld [vmem:[#allocation8 + $0x1e4] sm:$0xff]
    %v555 = vld [vmem:[#allocation8 + $0x1ec] sm:$0xff]
    %v556 = vld [vmem:[#allocation8 + $0x1f4] sm:$0xf]
    %v557 = vld [vmem:[#allocation8 + $0x1f8] sm:$0xff]
    %v558 = vld [vmem:[#allocation8 + $0x200] sm:$0xff]
    %v559 = vld [vmem:[#allocation8 + $0x208] sm:$0xff]
    %v560 = vld [vmem:[#allocation8 + $0x210] sm:$0xf]
    %v561 = vld [vmem:[#allocation8 + $0x214] sm:$0xff]
    %v562 = vld [vmem:[#allocation8 + $0x21c] sm:$0xff]
    %v563 = vld [vmem:[#allocation8 + $0x224] sm:$0xff]
    %v564 = vld [vmem:[#allocation8 + $0x22c] sm:$0xf]
    %v565 = vld [vmem:[#allocation8 + $0x230] sm:$0xff]
    %v566 = vld [vmem:[#allocation8 + $0x238] sm:$0xff]
    %v567 = vld [vmem:[#allocation8 + $0x240] sm:$0xff]
    %v568 = vld [vmem:[#allocation8 + $0x248] sm:$0xf]
    %v569 = vld [vmem:[#allocation8 + $0x24c] sm:$0xff]
    %v570 = vld [vmem:[#allocation8 + $0x254] sm:$0xff]
    %v571 = vld [vmem:[#allocation8 + $0x25c] sm:$0xff]
    %v572 = vld [vmem:[#allocation8 + $0x264] sm:$0xf]
    %v573 = vld [vmem:[#allocation8 + $0x268] sm:$0xff]
    %v574 = vld [vmem:[#allocation8 + $0x270] sm:$0xff]
    %v575 = vld [vmem:[#allocation8 + $0x278] sm:$0xff]
    %v576 = vld [vmem:[#allocation8 + $0x280] sm:$0xf]
    %v577 = vld [vmem:[#allocation8 + $0x284] sm:$0xff]
    %v578 = vld [vmem:[#allocation8 + $0x28c] sm:$0xff]
    %v579 = vld [vmem:[#allocation8 + $0x294] sm:$0xff]
    %v580 = vld [vmem:[#allocation8 + $0x29c] sm:$0xf]
    %v581 = vld [vmem:[#allocation8 + $0x2a0] sm:$0xff]
    %v582 = vld [vmem:[#allocation8 + $0x2a8] sm:$0xff]
    %v583 = vld [vmem:[#allocation8 + $0x2b0] sm:$0xff]
    %v584 = vld [vmem:[#allocation8 + $0x2b8] sm:$0xf]
    %v585 = vld [vmem:[#allocation8 + $0x2bc] sm:$0xff]
    %v586 = vld [vmem:[#allocation8 + $0x2c4] sm:$0xff]
    %v587 = vld [vmem:[#allocation8 + $0x2cc] sm:$0xff]
    %v588 = vld [vmem:[#allocation8 + $0x2d4] sm:$0xf]
    %v589 = vld [vmem:[#allocation8 + $0x2d8] sm:$0xff]
    %v590 = vld [vmem:[#allocation8 + $0x2e0] sm:$0xff]
    %v591 = vld [vmem:[#allocation8 + $0x2e8] sm:$0xff]
    %v592 = vld [vmem:[#allocation8 + $0x2f0] sm:$0xf]
    %v593 = vld [vmem:[#allocation8 + $0x2f4] sm:$0xff]
    %v594 = vld [vmem:[#allocation8 + $0x2fc] sm:$0xff]
    %v595 = vld [vmem:[#allocation8 + $0x304] sm:$0xff]
    %v596 = vld [vmem:[#allocation8 + $0x30c] sm:$0xf]
    %v597 = vld [vmem:[#allocation8 + $0x310] sm:$0xff]
    %v598 = vld [vmem:[#allocation8 + $0x318] sm:$0xff]
    %v599 = vld [vmem:[#allocation8 + $0x320] sm:$0xff]
    %v600 = vld [vmem:[#allocation8 + $0x328] sm:$0xf]
    %v601 = vld [vmem:[#allocation8 + $0x32c] sm:$0xff]
    %v602 = vld [vmem:[#allocation8 + $0x334] sm:$0xff]
    %v603 = vld [vmem:[#allocation8 + $0x33c] sm:$0xff]
    %v604 = vld [vmem:[#allocation8 + $0x344] sm:$0xf]
    %v605 = vld [vmem:[#allocation8 + $0x348] sm:$0xff]
    %v606 = vld [vmem:[#allocation8 + $0x350] sm:$0xff]
    %v607 = vld [vmem:[#allocation8 + $0x358] sm:$0xff]
    %v608 = vld [vmem:[#allocation8 + $0x360] sm:$0xf]
    %v609 = vld [vmem:[#allocation8 + $0x364] sm:$0xff]
    %v610 = vld [vmem:[#allocation8 + $0x36c] sm:$0xff]
    %v611 = vld [vmem:[#allocation8 + $0x374] sm:$0xff]
    %v612 = vld [vmem:[#allocation8 + $0x37c] sm:$0xf]
    %v613 = vld [vmem:[%s6] sm:$0xff]
    %v615 = vlaneseq
    %v616 = vshrl.u32 %v615, 7
    %v617 = vsub.s32 0, %v616
    %v618 = vrot.slane %v613, %v617
    %v619 = vlaneseq
    %v620 = vshrl.u32 %v619, 7
    %v621 = vsub.s32 1, %v620
    %v622 = vrot.slane %v613, %v621
    %v623 = vlaneseq
    %v624 = vshrl.u32 %v623, 7
    %v625 = vsub.s32 2, %v624
    %v626 = vrot.slane %v613, %v625
    %v627 = vlaneseq
    %v628 = vshrl.u32 %v627, 7
    %v629 = vsub.s32 3, %v628
    %v630 = vrot.slane %v613, %v629
    %v631 = vlaneseq
    %v632 = vshrl.u32 %v631, 7
    %v633 = vsub.s32 4, %v632
    %v634 = vrot.slane %v613, %v633
    %v635 = vlaneseq
    %v636 = vshrl.u32 %v635, 7
    %v637 = vsub.s32 5, %v636
    %v638 = vrot.slane %v613, %v637
    %v639 = vlaneseq
    %v640 = vshrl.u32 %v639, 7
    %v641 = vsub.s32 6, %v640
    %v642 = vrot.slane %v613, %v641
    %v778 = vunpack.c.l.b16 %v485
    %v779 = vunpack.c.h.b16 %v485
    %v780 = vunpack.c.l.b16 %v486
    %v781 = vunpack.c.h.b16 %v486
    %v782 = vunpack.c.l.b16 %v487
    %v783 = vunpack.c.h.b16 %v487
    %v784 = vunpack.c.l.b16 %v488
    %v785 = vunpack.c.l.b16 %v489
    %v786 = vunpack.c.h.b16 %v489
    %v787 = vunpack.c.l.b16 %v490
    %v788 = vunpack.c.h.b16 %v490
    %v789 = vunpack.c.l.b16 %v491
    %v790 = vunpack.c.h.b16 %v491
    %v791 = vunpack.c.l.b16 %v492
    %v792 = vunpack.c.l.b16 %v493
    %v793 = vunpack.c.h.b16 %v493
    %v794 = vunpack.c.l.b16 %v494
    %v795 = vunpack.c.h.b16 %v494
    %v796 = vunpack.c.l.b16 %v495
    %v797 = vunpack.c.h.b16 %v495
    %v798 = vunpack.c.l.b16 %v496
    %v799 = vunpack.c.l.b16 %v497
    %v800 = vunpack.c.h.b16 %v497
    %v801 = vunpack.c.l.b16 %v498
    %v802 = vunpack.c.h.b16 %v498
    %v803 = vunpack.c.l.b16 %v499
    %v804 = vunpack.c.h.b16 %v499
    %v805 = vunpack.c.l.b16 %v500
    %v806 = vunpack.c.l.b16 %v501
    %v807 = vunpack.c.h.b16 %v501
    %v808 = vunpack.c.l.b16 %v502
    %v809 = vunpack.c.h.b16 %v502
    %v810 = vunpack.c.l.b16 %v503
    %v811 = vunpack.c.h.b16 %v503
    %v812 = vunpack.c.l.b16 %v504
    %v813 = vunpack.c.l.b16 %v505
    %v814 = vunpack.c.h.b16 %v505
    %v815 = vunpack.c.l.b16 %v506
    %v816 = vunpack.c.h.b16 %v506
    %v817 = vunpack.c.l.b16 %v507
    %v818 = vunpack.c.h.b16 %v507
    %v819 = vunpack.c.l.b16 %v508
    %v820 = vunpack.c.l.b16 %v509
    %v821 = vunpack.c.h.b16 %v509
    %v822 = vunpack.c.l.b16 %v510
    %v823 = vunpack.c.h.b16 %v510
    %v824 = vunpack.c.l.b16 %v511
    %v825 = vunpack.c.h.b16 %v511
    %v826 = vunpack.c.l.b16 %v512
    %v827 = vunpack.c.l.b16 %v513
    %v828 = vunpack.c.h.b16 %v513
    %v829 = vunpack.c.l.b16 %v514
    %v830 = vunpack.c.h.b16 %v514
    %v831 = vunpack.c.l.b16 %v515
    %v832 = vunpack.c.h.b16 %v515
    %v833 = vunpack.c.l.b16 %v516
    %v834 = vunpack.c.l.b16 %v517
    %v835 = vunpack.c.h.b16 %v517
    %v836 = vunpack.c.l.b16 %v518
    %v837 = vunpack.c.h.b16 %v518
    %v838 = vunpack.c.l.b16 %v519
    %v839 = vunpack.c.h.b16 %v519
    %v840 = vunpack.c.l.b16 %v520
    %v841 = vunpack.c.l.b16 %v521
    %v842 = vunpack.c.h.b16 %v521
    %v843 = vunpack.c.l.b16 %v522
    %v844 = vunpack.c.h.b16 %v522
    %v845 = vunpack.c.l.b16 %v523
    %v846 = vunpack.c.h.b16 %v523
    %v847 = vunpack.c.l.b16 %v524
    %v848 = vunpack.c.l.b16 %v525
    %v849 = vunpack.c.h.b16 %v525
    %v850 = vunpack.c.l.b16 %v526
    %v851 = vunpack.c.h.b16 %v526
    %v852 = vunpack.c.l.b16 %v527
    %v853 = vunpack.c.h.b16 %v527
    %v854 = vunpack.c.l.b16 %v528
    %v855 = vunpack.c.l.b16 %v529
    %v856 = vunpack.c.h.b16 %v529
    %v857 = vunpack.c.l.b16 %v530
    %v858 = vunpack.c.h.b16 %v530
    %v859 = vunpack.c.l.b16 %v531
    %v860 = vunpack.c.h.b16 %v531
    %v861 = vunpack.c.l.b16 %v532
    %v862 = vunpack.c.l.b16 %v533
    %v863 = vunpack.c.h.b16 %v533
    %v864 = vunpack.c.l.b16 %v534
    %v865 = vunpack.c.h.b16 %v534
    %v866 = vunpack.c.l.b16 %v535
    %v867 = vunpack.c.h.b16 %v535
    %v868 = vunpack.c.l.b16 %v536
    %v869 = vunpack.c.l.b16 %v537
    %v870 = vunpack.c.h.b16 %v537
    %v871 = vunpack.c.l.b16 %v538
    %v872 = vunpack.c.h.b16 %v538
    %v873 = vunpack.c.l.b16 %v539
    %v874 = vunpack.c.h.b16 %v539
    %v875 = vunpack.c.l.b16 %v540
    %v876 = vunpack.c.l.b16 %v541
    %v877 = vunpack.c.h.b16 %v541
    %v878 = vunpack.c.l.b16 %v542
    %v879 = vunpack.c.h.b16 %v542
    %v880 = vunpack.c.l.b16 %v543
    %v881 = vunpack.c.h.b16 %v543
    %v882 = vunpack.c.l.b16 %v544
    %v883 = vunpack.c.l.b16 %v545
    %v884 = vunpack.c.h.b16 %v545
    %v885 = vunpack.c.l.b16 %v546
    %v886 = vunpack.c.h.b16 %v546
    %v887 = vunpack.c.l.b16 %v547
    %v888 = vunpack.c.h.b16 %v547
    %v889 = vunpack.c.l.b16 %v548
    %v890 = vunpack.c.l.b16 %v549
    %v891 = vunpack.c.h.b16 %v549
    %v892 = vunpack.c.l.b16 %v550
    %v893 = vunpack.c.h.b16 %v550
    %v894 = vunpack.c.l.b16 %v551
    %v895 = vunpack.c.h.b16 %v551
    %v896 = vunpack.c.l.b16 %v552
    %v897 = vunpack.c.l.b16 %v553
    %v898 = vunpack.c.h.b16 %v553
    %v899 = vunpack.c.l.b16 %v554
    %v900 = vunpack.c.h.b16 %v554
    %v901 = vunpack.c.l.b16 %v555
    %v902 = vunpack.c.h.b16 %v555
    %v903 = vunpack.c.l.b16 %v556
    %v904 = vunpack.c.l.b16 %v557
    %v905 = vunpack.c.h.b16 %v557
    %v906 = vunpack.c.l.b16 %v558
    %v907 = vunpack.c.h.b16 %v558
    %v908 = vunpack.c.l.b16 %v559
    %v909 = vunpack.c.h.b16 %v559
    %v910 = vunpack.c.l.b16 %v560
    %v911 = vunpack.c.l.b16 %v561
    %v912 = vunpack.c.h.b16 %v561
    %v913 = vunpack.c.l.b16 %v562
    %v914 = vunpack.c.h.b16 %v562
    %v915 = vunpack.c.l.b16 %v563
    %v916 = vunpack.c.h.b16 %v563
    %v917 = vunpack.c.l.b16 %v564
    %v918 = vunpack.c.l.b16 %v565
    %v919 = vunpack.c.h.b16 %v565
    %v920 = vunpack.c.l.b16 %v566
    %v921 = vunpack.c.h.b16 %v566
    %v922 = vunpack.c.l.b16 %v567
    %v923 = vunpack.c.h.b16 %v567
    %v924 = vunpack.c.l.b16 %v568
    %v925 = vunpack.c.l.b16 %v569
    %v926 = vunpack.c.h.b16 %v569
    %v927 = vunpack.c.l.b16 %v570
    %v928 = vunpack.c.h.b16 %v570
    %v929 = vunpack.c.l.b16 %v571
    %v930 = vunpack.c.h.b16 %v571
    %v931 = vunpack.c.l.b16 %v572
    %v932 = vunpack.c.l.b16 %v573
    %v933 = vunpack.c.h.b16 %v573
    %v934 = vunpack.c.l.b16 %v574
    %v935 = vunpack.c.h.b16 %v574
    %v936 = vunpack.c.l.b16 %v575
    %v937 = vunpack.c.h.b16 %v575
    %v938 = vunpack.c.l.b16 %v576
    %v939 = vunpack.c.l.b16 %v577
    %v940 = vunpack.c.h.b16 %v577
    %v941 = vunpack.c.l.b16 %v578
    %v942 = vunpack.c.h.b16 %v578
    %v943 = vunpack.c.l.b16 %v579
    %v944 = vunpack.c.h.b16 %v579
    %v945 = vunpack.c.l.b16 %v580
    %v946 = vunpack.c.l.b16 %v581
    %v947 = vunpack.c.h.b16 %v581
    %v948 = vunpack.c.l.b16 %v582
    %v949 = vunpack.c.h.b16 %v582
    %v950 = vunpack.c.l.b16 %v583
    %v951 = vunpack.c.h.b16 %v583
    %v952 = vunpack.c.l.b16 %v584
    %v953 = vunpack.c.l.b16 %v585
    %v954 = vunpack.c.h.b16 %v585
    %v955 = vunpack.c.l.b16 %v586
    %v956 = vunpack.c.h.b16 %v586
    %v957 = vunpack.c.l.b16 %v587
    %v958 = vunpack.c.h.b16 %v587
    %v959 = vunpack.c.l.b16 %v588
    %v960 = vunpack.c.l.b16 %v589
    %v961 = vunpack.c.h.b16 %v589
    %v962 = vunpack.c.l.b16 %v590
    %v963 = vunpack.c.h.b16 %v590
    %v964 = vunpack.c.l.b16 %v591
    %v965 = vunpack.c.h.b16 %v591
    %v966 = vunpack.c.l.b16 %v592
    %v967 = vunpack.c.l.b16 %v593
    %v968 = vunpack.c.h.b16 %v593
    %v969 = vunpack.c.l.b16 %v594
    %v970 = vunpack.c.h.b16 %v594
    %v971 = vunpack.c.l.b16 %v595
    %v972 = vunpack.c.h.b16 %v595
    %v973 = vunpack.c.l.b16 %v596
    %v974 = vunpack.c.l.b16 %v597
    %v975 = vunpack.c.h.b16 %v597
    %v976 = vunpack.c.l.b16 %v598
    %v977 = vunpack.c.h.b16 %v598
    %v978 = vunpack.c.l.b16 %v599
    %v979 = vunpack.c.h.b16 %v599
    %v980 = vunpack.c.l.b16 %v600
    %v981 = vunpack.c.l.b16 %v601
    %v982 = vunpack.c.h.b16 %v601
    %v983 = vunpack.c.l.b16 %v602
    %v984 = vunpack.c.h.b16 %v602
    %v985 = vunpack.c.l.b16 %v603
    %v986 = vunpack.c.h.b16 %v603
    %v987 = vunpack.c.l.b16 %v604
    %v988 = vunpack.c.l.b16 %v605
    %v989 = vunpack.c.h.b16 %v605
    %v990 = vunpack.c.l.b16 %v606
    %v991 = vunpack.c.h.b16 %v606
    %v992 = vunpack.c.l.b16 %v607
    %v993 = vunpack.c.h.b16 %v607
    %v994 = vunpack.c.l.b16 %v608
    %v995 = vunpack.c.l.b16 %v609
    %v996 = vunpack.c.h.b16 %v609
    %v997 = vunpack.c.l.b16 %v610
    %v998 = vunpack.c.h.b16 %v610
    %v999 = vunpack.c.l.b16 %v611
    %v1000 = vunpack.c.h.b16 %v611
    %v1001 = vunpack.c.l.b16 %v612
    %v1002 = vpack.c.b16 %v785, %v778
    %v1003 = vpack.c.b16 %v786, %v779
    %v1004 = vpack.c.b16 %v787, %v780
    %v1005 = vpack.c.b16 %v788, %v781
    %v1006 = vpack.c.b16 %v789, %v782
    %v1007 = vpack.c.b16 %v790, %v783
    %v1008 = vpack.c.b16 %v791, %v784
    %v1009 = vpack.c.b16 %v799, %v792
    %v1010 = vpack.c.b16 %v800, %v793
    %v1011 = vpack.c.b16 %v801, %v794
    %v1012 = vpack.c.b16 %v802, %v795
    %v1013 = vpack.c.b16 %v803, %v796
    %v1014 = vpack.c.b16 %v804, %v797
    %v1015 = vpack.c.b16 %v805, %v798
    %v1016 = vpack.c.b16 %v813, %v806
    %v1017 = vpack.c.b16 %v814, %v807
    %v1018 = vpack.c.b16 %v815, %v808
    %v1019 = vpack.c.b16 %v816, %v809
    %v1020 = vpack.c.b16 %v817, %v810
    %v1021 = vpack.c.b16 %v818, %v811
    %v1022 = vpack.c.b16 %v819, %v812
    %v1023 = vpack.c.b16 %v827, %v820
    %v1024 = vpack.c.b16 %v828, %v821
    %v1025 = vpack.c.b16 %v829, %v822
    %v1026 = vpack.c.b16 %v830, %v823
    %v1027 = vpack.c.b16 %v831, %v824
    %v1028 = vpack.c.b16 %v832, %v825
    %v1029 = vpack.c.b16 %v833, %v826
    %v1030 = vpack.c.b16 %v841, %v834
    %v1031 = vpack.c.b16 %v842, %v835
    %v1032 = vpack.c.b16 %v843, %v836
    %v1033 = vpack.c.b16 %v844, %v837
    %v1034 = vpack.c.b16 %v845, %v838
    %v1035 = vpack.c.b16 %v846, %v839
    %v1036 = vpack.c.b16 %v847, %v840
    %v1037 = vpack.c.b16 %v855, %v848
    %v1038 = vpack.c.b16 %v856, %v849
    %v1039 = vpack.c.b16 %v857, %v850
    %v1040 = vpack.c.b16 %v858, %v851
    %v1041 = vpack.c.b16 %v859, %v852
    %v1042 = vpack.c.b16 %v860, %v853
    %v1043 = vpack.c.b16 %v861, %v854
    %v1044 = vpack.c.b16 %v869, %v862
    %v1045 = vpack.c.b16 %v870, %v863
    %v1046 = vpack.c.b16 %v871, %v864
    %v1047 = vpack.c.b16 %v872, %v865
    %v1048 = vpack.c.b16 %v873, %v866
    %v1049 = vpack.c.b16 %v874, %v867
    %v1050 = vpack.c.b16 %v875, %v868
    %v1051 = vpack.c.b16 %v883, %v876
    %v1052 = vpack.c.b16 %v884, %v877
    %v1053 = vpack.c.b16 %v885, %v878
    %v1054 = vpack.c.b16 %v886, %v879
    %v1055 = vpack.c.b16 %v887, %v880
    %v1056 = vpack.c.b16 %v888, %v881
    %v1057 = vpack.c.b16 %v889, %v882
    %v1058 = vpack.c.b16 %v897, %v890
    %v1059 = vpack.c.b16 %v898, %v891
    %v1060 = vpack.c.b16 %v899, %v892
    %v1061 = vpack.c.b16 %v900, %v893
    %v1062 = vpack.c.b16 %v901, %v894
    %v1063 = vpack.c.b16 %v902, %v895
    %v1064 = vpack.c.b16 %v903, %v896
    %v1065 = vpack.c.b16 %v911, %v904
    %v1066 = vpack.c.b16 %v912, %v905
    %v1067 = vpack.c.b16 %v913, %v906
    %v1068 = vpack.c.b16 %v914, %v907
    %v1069 = vpack.c.b16 %v915, %v908
    %v1070 = vpack.c.b16 %v916, %v909
    %v1071 = vpack.c.b16 %v917, %v910
    %v1072 = vpack.c.b16 %v925, %v918
    %v1073 = vpack.c.b16 %v926, %v919
    %v1074 = vpack.c.b16 %v927, %v920
    %v1075 = vpack.c.b16 %v928, %v921
    %v1076 = vpack.c.b16 %v929, %v922
    %v1077 = vpack.c.b16 %v930, %v923
    %v1078 = vpack.c.b16 %v931, %v924
    %v1079 = vpack.c.b16 %v939, %v932
    %v1080 = vpack.c.b16 %v940, %v933
    %v1081 = vpack.c.b16 %v941, %v934
    %v1082 = vpack.c.b16 %v942, %v935
    %v1083 = vpack.c.b16 %v943, %v936
    %v1084 = vpack.c.b16 %v944, %v937
    %v1085 = vpack.c.b16 %v945, %v938
    %v1086 = vpack.c.b16 %v953, %v946
    %v1087 = vpack.c.b16 %v954, %v947
    %v1088 = vpack.c.b16 %v955, %v948
    %v1089 = vpack.c.b16 %v956, %v949
    %v1090 = vpack.c.b16 %v957, %v950
    %v1091 = vpack.c.b16 %v958, %v951
    %v1092 = vpack.c.b16 %v959, %v952
    %v1093 = vpack.c.b16 %v967, %v960
    %v1094 = vpack.c.b16 %v968, %v961
    %v1095 = vpack.c.b16 %v969, %v962
    %v1096 = vpack.c.b16 %v970, %v963
    %v1097 = vpack.c.b16 %v971, %v964
    %v1098 = vpack.c.b16 %v972, %v965
    %v1099 = vpack.c.b16 %v973, %v966
    %v1100 = vpack.c.b16 %v981, %v974
    %v1101 = vpack.c.b16 %v982, %v975
    %v1102 = vpack.c.b16 %v983, %v976
    %v1103 = vpack.c.b16 %v984, %v977
    %v1104 = vpack.c.b16 %v985, %v978
    %v1105 = vpack.c.b16 %v986, %v979
    %v1106 = vpack.c.b16 %v987, %v980
    %v1107 = vpack.c.b16 %v995, %v988
    %v1108 = vpack.c.b16 %v996, %v989
    %v1109 = vpack.c.b16 %v997, %v990
    %v1110 = vpack.c.b16 %v998, %v991
    %v1111 = vpack.c.b16 %v999, %v992
    %v1112 = vpack.c.b16 %v1000, %v993
    %v1113 = vpack.c.b16 %v1001, %v994
    %1226 = vmatprep.subr.bf16.mxu0 %v1003
    %1227 = vmatpush1.bf16.msra.mxu0 %v1002
    %1228 = vmatprep.subr.bf16.mxu0 %v1010
    %1229 = vmatpush1.bf16.msra.mxu0 %v1009
    %1230 = vmatprep.subr.bf16.mxu0 %v1017
    %1231 = vmatpush1.bf16.msra.mxu0 %v1016
    %1232 = vmatprep.subr.bf16.mxu0 %v1024
    %1233 = vmatpush1.bf16.msra.mxu0 %v1023
    %1234 = vmatprep.subr.bf16.mxu0 %v1031
    %1235 = vmatpush1.bf16.msra.mxu0 %v1030
    %1236 = vmatprep.subr.bf16.mxu0 %v1038
    %1237 = vmatpush1.bf16.msra.mxu0 %v1037
    %1238 = vmatprep.subr.bf16.mxu0 %v1045
    %1239 = vmatpush1.bf16.msra.mxu0 %v1044
    %1240 = vmatprep.subr.bf16.mxu0 %v1052
    %1241 = vmatpush1.bf16.msra.mxu0 %v1051
    %1242 = vmatprep.subr.bf16.mxu0 %v1059
    %1243 = vmatpush1.bf16.msra.mxu0 %v1058
    %1244 = vmatprep.subr.bf16.mxu0 %v1066
    %1245 = vmatpush1.bf16.msra.mxu0 %v1065
    %1246 = vmatprep.subr.bf16.mxu0 %v1073
    %1247 = vmatpush1.bf16.msra.mxu0 %v1072
    %1248 = vmatprep.subr.bf16.mxu0 %v1080
    %1249 = vmatpush1.bf16.msra.mxu0 %v1079
    %1250 = vmatprep.subr.bf16.mxu0 %v1087
    %1251 = vmatpush1.bf16.msra.mxu0 %v1086
    %1252 = vmatprep.subr.bf16.mxu0 %v1094
    %1253 = vmatpush1.bf16.msra.mxu0 %v1093
    %1254 = vmatprep.subr.bf16.mxu0 %v1101
    %1255 = vmatpush1.bf16.msra.mxu0 %v1100
    %1256 = vmatprep.subr.bf16.mxu0 %v1108
    %1257 = vmatpush1.bf16.msra.mxu0 %v1107
    %1258 = vmatprep.mubr.bf16.mxu0 %v484
    %1259 = vmatmul.mubr.bf16.gmra.mrb[0].mxu0 %v483
    %v1260 = vpop.f32.mrb[0].mxu0
    %v1261 = vadd.f32 %v618, %v1260
    %v1262 = vpop.f32.mrb[0].mxu0
    %v1263 = vadd.f32 %v622, %v1262
    %v1264 = vpop.f32.mrb[0].mxu0
    %v1265 = vpop.f32.mrb[0].mxu0
    %1266 = vdwg.mxu0
    %1267 = vmatprep.subr.bf16.mxu0 %v1005
    %1268 = vmatpush1.bf16.msra.mxu0 %v1004
    %1269 = vmatprep.subr.bf16.mxu0 %v1012
    %1270 = vmatpush1.bf16.msra.mxu0 %v1011
    %1271 = vmatprep.subr.bf16.mxu0 %v1019
    %1272 = vmatpush1.bf16.msra.mxu0 %v1018
    %1273 = vmatprep.subr.bf16.mxu0 %v1026
    %1274 = vmatpush1.bf16.msra.mxu0 %v1025
    %1275 = vmatprep.subr.bf16.mxu0 %v1033
    %1276 = vmatpush1.bf16.msra.mxu0 %v1032
    %1277 = vmatprep.subr.bf16.mxu0 %v1040
    %1278 = vmatpush1.bf16.msra.mxu0 %v1039
    %1279 = vmatprep.subr.bf16.mxu0 %v1047
    %1280 = vmatpush1.bf16.msra.mxu0 %v1046
    %1281 = vmatprep.subr.bf16.mxu0 %v1054
    %1282 = vmatpush1.bf16.msra.mxu0 %v1053
    %1283 = vmatprep.subr.bf16.mxu0 %v1061
    %1284 = vmatpush1.bf16.msra.mxu0 %v1060
    %1285 = vmatprep.subr.bf16.mxu0 %v1068
    %1286 = vmatpush1.bf16.msra.mxu0 %v1067
    %1287 = vmatprep.subr.bf16.mxu0 %v1075
    %1288 = vmatpush1.bf16.msra.mxu0 %v1074
    %1289 = vmatprep.subr.bf16.mxu0 %v1082
    %1290 = vmatpush1.bf16.msra.mxu0 %v1081
    %1291 = vmatprep.subr.bf16.mxu0 %v1089
    %1292 = vmatpush1.bf16.msra.mxu0 %v1088
    %1293 = vmatprep.subr.bf16.mxu0 %v1096
    %1294 = vmatpush1.bf16.msra.mxu0 %v1095
    %1295 = vmatprep.subr.bf16.mxu0 %v1103
    %1296 = vmatpush1.bf16.msra.mxu0 %v1102
    %1297 = vmatprep.subr.bf16.mxu0 %v1110
    %1298 = vmatpush1.bf16.msra.mxu0 %v1109
    %1299 = vmatprep.mubr.bf16.mxu0 %v484
    %1300 = vmatmul.mubr.bf16.gmra.mrb[0].mxu0 %v483
    %v1301 = vpop.f32.mrb[0].mxu0
    %v1302 = vadd.f32 %v626, %v1301
    %v1303 = vpop.f32.mrb[0].mxu0
    %v1304 = vadd.f32 %v630, %v1303
    %v1305 = vpop.f32.mrb[0].mxu0
    %v1306 = vpop.f32.mrb[0].mxu0
    %1307 = vdwg.mxu0
    %1308 = vmatprep.subr.bf16.mxu0 %v1007
    %1309 = vmatpush1.bf16.msra.mxu0 %v1006
    %1310 = vmatprep.subr.bf16.mxu0 %v1014
    %1311 = vmatpush1.bf16.msra.mxu0 %v1013
    %1312 = vmatprep.subr.bf16.mxu0 %v1021
    %1313 = vmatpush1.bf16.msra.mxu0 %v1020
    %1314 = vmatprep.subr.bf16.mxu0 %v1028
    %1315 = vmatpush1.bf16.msra.mxu0 %v1027
    %1316 = vmatprep.subr.bf16.mxu0 %v1035
    %1317 = vmatpush1.bf16.msra.mxu0 %v1034
    %1318 = vmatprep.subr.bf16.mxu0 %v1042
    %1319 = vmatpush1.bf16.msra.mxu0 %v1041
    %1320 = vmatprep.subr.bf16.mxu0 %v1049
    %1321 = vmatpush1.bf16.msra.mxu0 %v1048
    %1322 = vmatprep.subr.bf16.mxu0 %v1056
    %1323 = vmatpush1.bf16.msra.mxu0 %v1055
    %1324 = vmatprep.subr.bf16.mxu0 %v1063
    %1325 = vmatpush1.bf16.msra.mxu0 %v1062
    %1326 = vmatprep.subr.bf16.mxu0 %v1070
    %1327 = vmatpush1.bf16.msra.mxu0 %v1069
    %1328 = vmatprep.subr.bf16.mxu0 %v1077
    %1329 = vmatpush1.bf16.msra.mxu0 %v1076
    %1330 = vmatprep.subr.bf16.mxu0 %v1084
    %1331 = vmatpush1.bf16.msra.mxu0 %v1083
    %1332 = vmatprep.subr.bf16.mxu0 %v1091
    %1333 = vmatpush1.bf16.msra.mxu0 %v1090
    %1334 = vmatprep.subr.bf16.mxu0 %v1098
    %1335 = vmatpush1.bf16.msra.mxu0 %v1097
    %1336 = vmatprep.subr.bf16.mxu0 %v1105
    %1337 = vmatpush1.bf16.msra.mxu0 %v1104
    %1338 = vmatprep.subr.bf16.mxu0 %v1112
    %1339 = vmatpush1.bf16.msra.mxu0 %v1111
    %1340 = vmatprep.mubr.bf16.mxu0 %v484
    %1341 = vmatmul.mubr.bf16.gmra.mrb[0].mxu0 %v483
    %v1342 = vpop.f32.mrb[0].mxu0
    %v1343 = vadd.f32 %v634, %v1342
    %v1344 = vpop.f32.mrb[0].mxu0
    %v1345 = vadd.f32 %v638, %v1344
    %v1346 = vpop.f32.mrb[0].mxu0
    %v1347 = vpop.f32.mrb[0].mxu0
    %1348 = vdwg.mxu0
    %1349 = vmatprep.subr.bf16.mxu0 0
    %1350 = vmatpush1.bf16.msra.mxu0 %v1008
    %1351 = vmatprep.subr.bf16.mxu0 0
    %1352 = vmatpush1.bf16.msra.mxu0 %v1015
    %1353 = vmatprep.subr.bf16.mxu0 0
    %1354 = vmatpush1.bf16.msra.mxu0 %v1022
    %1355 = vmatprep.subr.bf16.mxu0 0
    %1356 = vmatpush1.bf16.msra.mxu0 %v1029
    %1357 = vmatprep.subr.bf16.mxu0 0
    %1358 = vmatpush1.bf16.msra.mxu0 %v1036
    %1359 = vmatprep.subr.bf16.mxu0 0
    %1360 = vmatpush1.bf16.msra.mxu0 %v1043
    %1361 = vmatprep.subr.bf16.mxu0 0
    %1362 = vmatpush1.bf16.msra.mxu0 %v1050
    %1363 = vmatprep.subr.bf16.mxu0 0
    %1364 = vmatpush1.bf16.msra.mxu0 %v1057
    %1365 = vmatprep.subr.bf16.mxu0 0
    %1366 = vmatpush1.bf16.msra.mxu0 %v1064
    %1367 = vmatprep.subr.bf16.mxu0 0
    %1368 = vmatpush1.bf16.msra.mxu0 %v1071
    %1369 = vmatprep.subr.bf16.mxu0 0
    %1370 = vmatpush1.bf16.msra.mxu0 %v1078
    %1371 = vmatprep.subr.bf16.mxu0 0
    %1372 = vmatpush1.bf16.msra.mxu0 %v1085
    %1373 = vmatprep.subr.bf16.mxu0 0
    %1374 = vmatpush1.bf16.msra.mxu0 %v1092
    %1375 = vmatprep.subr.bf16.mxu0 0
    %1376 = vmatpush1.bf16.msra.mxu0 %v1099
    %1377 = vmatprep.subr.bf16.mxu0 0
    %1378 = vmatpush1.bf16.msra.mxu0 %v1106
    %1379 = vmatprep.subr.bf16.mxu0 0
    %1380 = vmatpush1.bf16.msra.mxu0 %v1113
    %1381 = vmatprep.mubr.bf16.mxu0 %v484
    %1382 = vmatmul.mubr.bf16.gmra.mrb[0].mxu0 %v483
    %v1383 = vpop.f32.mrb[0].mxu0
    %v1384 = vadd.f32 %v642, %v1383
    %v1385 = vpop.f32.mrb[0].mxu0
    %v1386 = vpop.f32.mrb[0].mxu0
    %v1387 = vpop.f32.mrb[0].mxu0
    %1388 = vdwg.mxu0
    %v1389 = vsub.f32 0.0, %v1261
    %v1390 = vsub.f32 0.0, %v1263
    %v1391 = vsub.f32 0.0, %v1302
    %v1392 = vsub.f32 0.0, %v1304
    %v1393 = vsub.f32 0.0, %v1343
    %v1394 = vsub.f32 0.0, %v1345
    %v1395 = vsub.f32 0.0, %v1384
    %v1396 = vmul.f32 %v1389, 1.442695
    %v1397 = vpow.pop %v1396
    %v1398 = vmul.f32 %v1390, 1.442695
    %v1399 = vpow.pop %v1398
    %v1400 = vmul.f32 %v1391, 1.442695
    %v1401 = vpow.pop %v1400
    %v1402 = vmul.f32 %v1392, 1.442695
    %v1403 = vpow.pop %v1402
    %v1404 = vmul.f32 %v1393, 1.442695
    %v1405 = vpow.pop %v1404
    %v1406 = vmul.f32 %v1394, 1.442695
    %v1407 = vpow.pop %v1406
    %v1408 = vmul.f32 %v1395, 1.442695
    %v1409 = vpow.pop %v1408
    %v1410 = vadd.f32 %v1397, 1.0
    %v1411 = vadd.f32 %v1399, 1.0
    %v1412 = vadd.f32 %v1401, 1.0
    %v1413 = vadd.f32 %v1403, 1.0
    %v1414 = vadd.f32 %v1405, 1.0
    %v1415 = vadd.f32 %v1407, 1.0
    %v1416 = vadd.f32 %v1409, 1.0
    %v1417 = vrcp.pop %v1410
    %v1418 = vrcp.pop %v1411
    %v1419 = vrcp.pop %v1412
    %v1420 = vrcp.pop %v1413
    %v1421 = vrcp.pop %v1414
    %v1422 = vrcp.pop %v1415
    %v1423 = vrcp.pop %v1416
    %1424 = vst [vmem:[#allocation10] sm:$0xff] %v1417
    %1425 = vst [vmem:[#allocation10 + $0x8] sm:$0xff] %v1418
    %1426 = vst [vmem:[#allocation10 + $0x10] sm:$0xff] %v1419
    %1427 = vst [vmem:[#allocation10 + $0x18] sm:$0xff] %v1420
    %1428 = vst [vmem:[#allocation10 + $0x20] sm:$0xff] %v1421
    %1429 = vst [vmem:[#allocation10 + $0x28] sm:$0xff] %v1422
    %1430 = vst [vmem:[#allocation10 + $0x30] sm:$0xff] %v1423
    // Predicated region
    $region46: #{tpu_custom_call.1} parent=1 // pred_check
      _
    $region47: #{tpu_custom_call.1} parent=1 // pred_check_branch
      %1432 = sbr.rel (0) target = $region49
    $region48: #{tpu_custom_call.1} parent=1 // pred_region
      %s1434 = ssub.s32 896, 896
      %1435 = vsyncadd [#allocation4], %s1434
      %s1437 = sshll.u32 [#allocation10], 4
      %s1438 = int_to_ptr.vmem [resolvable:$true] %s1437
      %1440 = dma.vmem_to_hbm [thread:$0]  %s1438, 896, %s7, [#allocation4]
    $region49: #{tpu_custom_call.1} parent=1 // pred_fallthru
      _
    // Predicated region
    $region50: #{tpu_custom_call.1} parent=1 // pred_check
      _
    $region51: #{tpu_custom_call.1} parent=1 // pred_check_branch
      %1442 = sbr.rel (0) target = $region53
    $region52: #{tpu_custom_call.1} parent=1 // pred_region
      %1443 = dma.done [#allocation4], 896
    $region53: #{tpu_custom_call.1} parent=1 // pred_fallthru
      _
    %1444 = vsyncpa [#allocation3], 1
    %1445 = vsyncpa [#allocation6], 1
    %1446 = vsyncpa [#allocation9], 1
    %1447 = vsyncpa [#allocation4], 1

</llo_original>
